<compile_context>
chip_gen: v7x
topology: tpu7x:2x2x1
jax: 0.10.0
libtpu: 0.0.40
codegen_flags: <defaults>
</compile_context>

<pallas_src>
import jax
import jax.numpy as jnp
from jax.experimental import pallas as pl
from jax.experimental.pallas import tpu as pltpu

_MiB = 1024 * 1024


def _make_root_kernel(n_children: int, residual: bool):
    """Kernel over one (batch, spatial-tile) grid cell.

    refs layout: x_0..x_{k-1} (C_i, TM), w_0..w_{k-1} (Cout, C_i),
                 bias (Cout, 1), out (Cout, TM).
    """

    def kernel(*refs):
        x_refs = refs[:n_children]
        w_refs = refs[n_children:2 * n_children]
        bias_ref = refs[2 * n_children]
        o_ref = refs[2 * n_children + 1]

        # Partial dots over each child's channel slab (MXU, f32 accumulate).
        # Keep the `acc + dot` chain so the v7x MRB can accumulate in place.
        acc = jnp.dot(w_refs[0][...], x_refs[0][...],
                      preferred_element_type=jnp.float32)
        for i in range(1, n_children):
            acc = acc + jnp.dot(w_refs[i][...], x_refs[i][...],
                                preferred_element_type=jnp.float32)

        acc = acc + bias_ref[...]                      # (Cout, 1) lane-broadcast
        if residual:
            # children[0] has exactly Cout channels -> reuse its input tile.
            acc = acc + x_refs[0][...].astype(jnp.float32)

        o_ref[...] = jnp.maximum(acc, 0.0).astype(o_ref.dtype)

    return kernel


def _vmem_capacity_bytes():
    """Generation-aware VMEM capacity (conservative v7x default on failure)."""
    try:
        info = pltpu.get_tpu_info()
        cap = getattr(info, "vmem_capacity_bytes", None)
        if cap:
            return int(cap)
    except Exception:
        pass
    return 64 * _MiB


def root_forward(xs, weight, gamma, beta, running_mean, running_var, *,
                 residual, eps=1e-5, tm_cap=None, vmem_limit_bytes=None):
    """Root.forward for a list of NCHW inputs `xs`.

    weight: (Cout, Cin_total) -- 1x1 conv weight with trailing 1x1 dims
            squeezed out.  BatchNorm uses the given running stats (inference).
    """
    assert len(xs) >= 1
    n, _, h, w_sp = xs[0].shape
    hw = h * w_sp
    cs = [int(x.shape[1]) for x in xs]
    cin = sum(cs)
    cout = int(weight.shape[0])
    out_dtype = xs[0].dtype

    if residual and cs[0] != cout:
        raise ValueError(
            "residual path requires children[0] channels == out_channels "
            f"(got {cs[0]} vs {cout})")

    # ---- fold BN (inference) into the conv weight and a bias ---------------
    inv_std = jax.lax.rsqrt(running_var.astype(jnp.float32) + eps)
    scale = gamma.astype(jnp.float32) * inv_std                        # (Cout,)
    bias = beta.astype(jnp.float32) - running_mean.astype(jnp.float32) * scale
    w_scaled = weight.astype(jnp.float32) * scale[:, None]             # (Cout, Cin)

    offs = [0]
    for c in cs:
        offs.append(offs[-1] + c)
    # Per-child weight slabs, in the activation dtype (bf16 stays bf16 -> MXU native).
    w_parts = [w_scaled[:, offs[i]:offs[i + 1]].astype(xs[i].dtype)
               for i in range(len(xs))]
    bias_col = bias.reshape(cout, 1)                                   # f32

    # NCHW -> (N, C, H*W): a free trailing-dim reshape, no transpose/concat/pad.
    x_views = [x.reshape(x.shape[0], x.shape[1], hw) for x in xs]

    # ---- small-spatial stages: lane width < 128 -> masked vst on every step.
    # TODO(synk): lane-dense Pallas path folding batch into the lane axis;
    # for now fall back to plain XLA (these late-DLA 7x7 maps are tiny).
    if hw < 128:
        x_cat = jnp.concatenate([xv.astype(jnp.float32) for xv in x_views], axis=1)
        y = jnp.einsum("oc,nck->nok", w_scaled, x_cat) + bias[None, :, None]
        if residual:
            y = y + x_views[0].astype(jnp.float32)
        y = jnp.maximum(y, 0.0).astype(out_dtype)
        return y.reshape(n, cout, h, w_sp)

    # ---- generation-aware VMEM budget / tile caps ---------------------------
    vmem_cap = _vmem_capacity_bytes()
    if vmem_limit_bytes is None:
        # ~42 MiB on 64 MiB parts (v7x), ~100 MiB on 128 MiB parts (v5e/v6e).
        vmem_limit_bytes = 100 * _MiB if vmem_cap >= 96 * _MiB else 42 * _MiB
    if tm_cap is None:
        tm_cap = 8192 if vmem_limit_bytes >= 64 * _MiB else 2048
    # Tile chooser uses the same ceiling as the compiler, minus 10% headroom
    # for Mosaic internal scratch.
    budget = int(vmem_limit_bytes * 0.9)

    # ---- spatial (lane) tile size from the VMEM budget ----------------------
    x_bytes_per_col = sum(c * jnp.dtype(x.dtype).itemsize for c, x in zip(cs, xs))
    o_bytes_per_col = cout * jnp.dtype(out_dtype).itemsize
    stream_bytes_per_col = 2 * (x_bytes_per_col + o_bytes_per_col)  # double-buffered
    # Weights counted double-buffered (worst case if Buffered(1) is unavailable).
    w_bytes = (sum(2 * wp.size * jnp.dtype(wp.dtype).itemsize for wp in w_parts)
               + 2 * bias_col.size * 4)
    budget_cols = max(128, (budget - w_bytes) // max(1, stream_bytes_per_col))
    cap_cols = max(128, (min(int(tm_cap), int(budget_cols)) // 128) * 128)

    # cdiv tiling: tm is either the full spatial extent or a multiple of 128;
    # the partial last block (if any) is masked by Pallas, which is safe here
    # because each output column depends only on its own input column.
    tm = hw if hw <= cap_cols else cap_cols
    n_spatial = pl.cdiv(hw, tm)
    # Make sure there are at least 2 grid cells so both v7x TCs get work.
    if n * n_spatial < 2 and tm > 128:
        tm = max(128, ((tm // 2 + 127) // 128) * 128)   # 128-multiple (legal partial)
        n_spatial = pl.cdiv(hw, tm)
    grid = (n, n_spatial)

    flops = 2 * n * hw * cin * cout
    bytes_accessed = (sum(x.size * jnp.dtype(x.dtype).itemsize for x in xs)
                      + sum(wp.size * jnp.dtype(wp.dtype).itemsize for wp in w_parts)
                      + n * cout * hw * jnp.dtype(out_dtype).itemsize)
    cost = pl.CostEstimate(flops=flops, transcendentals=0,
                           bytes_accessed=bytes_accessed)

    def _run(single_buffer_resident):
        # Resident operands (constant index map): request single buffering to
        # halve their VMEM footprint; zero DMA cost since they never re-fetch.
        w_kwargs = ({"pipeline_mode": pl.Buffered(1)}
                    if single_buffer_resident else {})
        in_specs = []
        for c in cs:
            in_specs.append(pl.BlockSpec((None, c, tm), lambda b, j: (b, 0, j)))
        for c in cs:
            in_specs.append(pl.BlockSpec((cout, c), lambda b, j: (0, 0), **w_kwargs))
        in_specs.append(pl.BlockSpec((cout, 1), lambda b, j: (0, 0), **w_kwargs))
        out_spec = pl.BlockSpec((None, cout, tm), lambda b, j: (b, 0, j))

        y = pl.pallas_call(
            _make_root_kernel(len(xs), residual),
            out_shape=jax.ShapeDtypeStruct((n, cout, hw), out_dtype),
            grid=grid,
            in_specs=in_specs,
            out_specs=out_spec,
            compiler_params=pltpu.CompilerParams(
                dimension_semantics=("parallel", "parallel"),
                vmem_limit_bytes=int(vmem_limit_bytes)),
            cost_estimate=cost,
        )(*x_views, *w_parts, bias_col)
        return jax.block_until_ready(y)

    try:
        y = _run(True)            # single-buffered resident weights/bias
    except Exception:
        y = _run(False)           # fallback: default double-buffering

    # (N, Cout, H*W) -> NCHW: another free reshape.
    return y.reshape(n, cout, h, w_sp)


def _reference(xs, weight, gamma, beta, mean, var, residual, eps=1e-5):
    x = jnp.concatenate(xs, axis=1)  # NCHW concat on channels
    y = jnp.einsum("nchw,oc->nohw", x, weight)  # 1x1 conv, no bias
    inv_std = jax.lax.rsqrt(var + eps)
    y = (y - mean[None, :, None, None]) * (gamma * inv_std)[None, :, None, None] \
        + beta[None, :, None, None]
    if residual:
        y = y + xs[0]
    return jnp.maximum(y, 0.0)


if __name__ == "__main__":
    key = jax.random.PRNGKey(0)
    k1, k2, k3, k4, k5, k6, k7 = jax.random.split(key, 7)

    # Root(in_channels=8, out_channels=4, kernel_size=1, residual=True)
    # Two children, 4 channels each (children[0] must have out_channels for
    # the residual add, matching DLA usage).
    N, H, W = 2, 16, 16
    C0, C1 = 4, 4
    CIN, COUT = C0 + C1, 4

    x0 = jax.random.normal(k1, (N, C0, H, W), dtype=jnp.float32)
    x1 = jax.random.normal(k2, (N, C1, H, W), dtype=jnp.float32)

    # Conv weight squeezed from (COUT, CIN, 1, 1).
    weight = jax.random.normal(k3, (COUT, CIN), dtype=jnp.float32) * 0.1
    gamma = 1.0 + 0.1 * jax.random.normal(k4, (COUT,), dtype=jnp.float32)
    beta = 0.1 * jax.random.normal(k5, (COUT,), dtype=jnp.float32)
    running_mean = 0.05 * jax.random.normal(k6, (COUT,), dtype=jnp.float32)
    running_var = jnp.abs(1.0 + 0.1 * jax.random.normal(k7, (COUT,), dtype=jnp.float32))

    out = root_forward([x0, x1], weight, gamma, beta, running_mean, running_var,
                       residual=True)
    out = jax.block_until_ready(out)

    ref = _reference([x0, x1], weight, gamma, beta, running_mean, running_var,
                     residual=True)
    assert out.shape == (N, COUT, H, W)
    assert out.dtype == x0.dtype
    assert jnp.max(jnp.abs(out.astype(jnp.float32) - ref)) < 1e-4

    print("KERNEL_OK")
</pallas_src>

<mosaic_0001>
module attributes {stable_mosaic.version = 11 : i64} {
  func.func @kernel(%arg0: i32, %arg1: i32, %arg2: memref<1x4x256xf32, #tpu.memory_space<vmem>>, %arg3: memref<1x4x256xf32, #tpu.memory_space<vmem>>, %arg4: memref<4x4xf32, #tpu.memory_space<vmem>>, %arg5: memref<4x4xf32, #tpu.memory_space<vmem>>, %arg6: memref<4x1xf32, #tpu.memory_space<vmem>>, %arg7: memref<1x4x256xf32, #tpu.memory_space<vmem>>) attributes {dimension_semantics = [#tpu.dimension_semantics<parallel>, #tpu.dimension_semantics<parallel>], iteration_bounds = array<i64: 2, 1>, scalar_prefetch = 0 : i64, scratch_operands = 0 : i64, tpu.core_type = #tpu.core_type<tc>, window_params = [{transform_indices = @transform_0, window_bounds = array<i64: 1, 4, 256>}, {transform_indices = @transform_1, window_bounds = array<i64: 1, 4, 256>}, {pipeline_mode = #tpu.pipeline_mode<synchronous>, transform_indices = @transform_2, window_bounds = array<i64: 4, 4>}, {pipeline_mode = #tpu.pipeline_mode<synchronous>, transform_indices = @transform_3, window_bounds = array<i64: 4, 4>}, {pipeline_mode = #tpu.pipeline_mode<synchronous>, transform_indices = @transform_4, window_bounds = array<i64: 4, 1>}, {transform_indices = @transform_5, window_bounds = array<i64: 1, 4, 256>}]} {
    %c0 = arith.constant 0 : index
    %c0_0 = arith.constant 0 : index
    %0 = vector.load %arg4[%c0, %c0_0] : memref<4x4xf32, #tpu.memory_space<vmem>>, vector<4x4xf32>
    %c0_1 = arith.constant 0 : index
    %c0_2 = arith.constant 0 : index
    %c0_3 = arith.constant 0 : index
    %1 = vector.load %arg2[%c0_1, %c0_2, %c0_3] : memref<1x4x256xf32, #tpu.memory_space<vmem>>, vector<1x4x256xf32>
    %2 = vector.shape_cast %1 : vector<1x4x256xf32> to vector<4x256xf32>
    %cst = arith.constant dense<0.000000e+00> : vector<4x256xf32>
    %3 = tpu.matmul %0, %2, %cst {dimension_numbers = #tpu.dot_dimension_numbers<[1], [0], [0], [1], [0, 0, 1, 1], [], []>} : vector<4x4xf32>, vector<4x256xf32>, vector<4x256xf32> -> vector<4x256xf32>
    %c0_4 = arith.constant 0 : index
    %c0_5 = arith.constant 0 : index
    %4 = vector.load %arg5[%c0_4, %c0_5] : memref<4x4xf32, #tpu.memory_space<vmem>>, vector<4x4xf32>
    %c0_6 = arith.constant 0 : index
    %c0_7 = arith.constant 0 : index
    %c0_8 = arith.constant 0 : index
    %5 = vector.load %arg3[%c0_6, %c0_7, %c0_8] : memref<1x4x256xf32, #tpu.memory_space<vmem>>, vector<1x4x256xf32>
    %6 = vector.shape_cast %5 : vector<1x4x256xf32> to vector<4x256xf32>
    %cst_9 = arith.constant dense<0.000000e+00> : vector<4x256xf32>
    %7 = tpu.matmul %4, %6, %cst_9 {dimension_numbers = #tpu.dot_dimension_numbers<[1], [0], [0], [1], [0, 0, 1, 1], [], []>} : vector<4x4xf32>, vector<4x256xf32>, vector<4x256xf32> -> vector<4x256xf32>
    %8 = arith.addf %3, %7 : vector<4x256xf32>
    %c0_10 = arith.constant 0 : index
    %c0_11 = arith.constant 0 : index
    %9 = vector.load %arg6[%c0_10, %c0_11] : memref<4x1xf32, #tpu.memory_space<vmem>>, vector<4x1xf32>
    %10 = vector.broadcast %9 : vector<4x1xf32> to vector<4x256xf32>
    %11 = arith.addf %8, %10 : vector<4x256xf32>
    %c0_12 = arith.constant 0 : index
    %c0_13 = arith.constant 0 : index
    %c0_14 = arith.constant 0 : index
    %12 = vector.load %arg2[%c0_12, %c0_13, %c0_14] : memref<1x4x256xf32, #tpu.memory_space<vmem>>, vector<1x4x256xf32>
    %13 = vector.shape_cast %12 : vector<1x4x256xf32> to vector<4x256xf32>
    %14 = arith.addf %11, %13 : vector<4x256xf32>
    %cst_15 = arith.constant 0.000000e+00 : f32
    %15 = vector.broadcast %cst_15 : f32 to vector<4x256xf32>
    %16 = arith.maximumf %14, %15 : vector<4x256xf32>
    %c0_16 = arith.constant 0 : index
    %c0_17 = arith.constant 0 : index
    %c0_18 = arith.constant 0 : index
    %17 = vector.load %arg7[%c0_16, %c0_17, %c0_18] : memref<1x4x256xf32, #tpu.memory_space<vmem>>, vector<1x4x256xf32>
    %18 = vector.shape_cast %17 : vector<1x4x256xf32> to vector<4x256xf32>
    %19 = vector.shape_cast %16 : vector<4x256xf32> to vector<1x4x256xf32>
    tpu.vector_store %arg7[%c0_16, %c0_17, %c0_18], %19 {strides = array<i32>} : memref<1x4x256xf32, #tpu.memory_space<vmem>>, vector<1x4x256xf32>,
    return
  }
  func.func @transform_0(%arg0: i32, %arg1: i32) -> (i32, i32, i32) {
    %c0_i32 = arith.constant 0 : i32
    %c0_i32_0 = arith.constant 0 : i32
    return %arg0, %c0_i32, %arg1 : i32, i32, i32
  }
  func.func @transform_1(%arg0: i32, %arg1: i32) -> (i32, i32, i32) {
    %c0_i32 = arith.constant 0 : i32
    %c0_i32_0 = arith.constant 0 : i32
    return %arg0, %c0_i32, %arg1 : i32, i32, i32
  }
  func.func @transform_2(%arg0: i32, %arg1: i32) -> (i32, i32) {
    %c0_i32 = arith.constant 0 : i32
    %c0_i32_0 = arith.constant 0 : i32
    %c0_i32_1 = arith.constant 0 : i32
    return %c0_i32, %c0_i32_0 : i32, i32
  }
  func.func @transform_3(%arg0: i32, %arg1: i32) -> (i32, i32) {
    %c0_i32 = arith.constant 0 : i32
    %c0_i32_0 = arith.constant 0 : i32
    %c0_i32_1 = arith.constant 0 : i32
    return %c0_i32, %c0_i32_0 : i32, i32
  }
  func.func @transform_4(%arg0: i32, %arg1: i32) -> (i32, i32) {
    %c0_i32 = arith.constant 0 : i32
    %c0_i32_0 = arith.constant 0 : i32
    %c0_i32_1 = arith.constant 0 : i32
    return %c0_i32, %c0_i32_0 : i32, i32
  }
  func.func @transform_5(%arg0: i32, %arg1: i32) -> (i32, i32, i32) {
    %c0_i32 = arith.constant 0 : i32
    %c0_i32_0 = arith.constant 0 : i32
    return %arg0, %c0_i32, %arg1 : i32, i32, i32
  }
}

module attributes {stable_mosaic.version = 11 : i64} {
  func.func @kernel(%arg0: i32, %arg1: i32, %arg2: memref<1x4x256xf32, #tpu.memory_space<vmem>>, %arg3: memref<1x4x256xf32, #tpu.memory_space<vmem>>, %arg4: memref<4x4xf32, #tpu.memory_space<vmem>>, %arg5: memref<4x4xf32, #tpu.memory_space<vmem>>, %arg6: memref<4x1xf32, #tpu.memory_space<vmem>>, %arg7: memref<1x4x256xf32, #tpu.memory_space<vmem>>) attributes {dimension_semantics = [#tpu.dimension_semantics<parallel>, #tpu.dimension_semantics<parallel>], iteration_bounds = array<i64: 2, 1>, scalar_prefetch = 0 : i64, scratch_operands = 0 : i64, tpu.core_type = #tpu.core_type<tc>, window_params = [{transform_indices = @transform_0, window_bounds = array<i64: 1, 4, 256>}, {transform_indices = @transform_1, window_bounds = array<i64: 1, 4, 256>}, {pipeline_mode = #tpu.pipeline_mode<synchronous>, transform_indices = @transform_2, window_bounds = array<i64: 4, 4>}, {pipeline_mode = #tpu.pipeline_mode<synchronous>, transform_indices = @transform_3, window_bounds = array<i64: 4, 4>}, {pipeline_mode = #tpu.pipeline_mode<synchronous>, transform_indices = @transform_4, window_bounds = array<i64: 4, 1>}, {transform_indices = @transform_5, window_bounds = array<i64: 1, 4, 256>}]} {
    %c0 = arith.constant 0 : index
    %c0_0 = arith.constant 0 : index
    %0 = vector.load %arg4[%c0, %c0_0] : memref<4x4xf32, #tpu.memory_space<vmem>>, vector<4x4xf32>
    %c0_1 = arith.constant 0 : index
    %c0_2 = arith.constant 0 : index
    %c0_3 = arith.constant 0 : index
    %1 = vector.load %arg2[%c0_1, %c0_2, %c0_3] : memref<1x4x256xf32, #tpu.memory_space<vmem>>, vector<1x4x256xf32>
    %2 = vector.shape_cast %1 : vector<1x4x256xf32> to vector<4x256xf32>
    %cst = arith.constant dense<0.000000e+00> : vector<4x256xf32>
    %3 = tpu.matmul %0, %2, %cst {dimension_numbers = #tpu.dot_dimension_numbers<[1], [0], [0], [1], [0, 0, 1, 1], [], []>} : vector<4x4xf32>, vector<4x256xf32>, vector<4x256xf32> -> vector<4x256xf32>
    %c0_4 = arith.constant 0 : index
    %c0_5 = arith.constant 0 : index
    %4 = vector.load %arg5[%c0_4, %c0_5] : memref<4x4xf32, #tpu.memory_space<vmem>>, vector<4x4xf32>
    %c0_6 = arith.constant 0 : index
    %c0_7 = arith.constant 0 : index
    %c0_8 = arith.constant 0 : index
    %5 = vector.load %arg3[%c0_6, %c0_7, %c0_8] : memref<1x4x256xf32, #tpu.memory_space<vmem>>, vector<1x4x256xf32>
    %6 = vector.shape_cast %5 : vector<1x4x256xf32> to vector<4x256xf32>
    %cst_9 = arith.constant dense<0.000000e+00> : vector<4x256xf32>
    %7 = tpu.matmul %4, %6, %cst_9 {dimension_numbers = #tpu.dot_dimension_numbers<[1], [0], [0], [1], [0, 0, 1, 1], [], []>} : vector<4x4xf32>, vector<4x256xf32>, vector<4x256xf32> -> vector<4x256xf32>
    %8 = arith.addf %3, %7 : vector<4x256xf32>
    %c0_10 = arith.constant 0 : index
    %c0_11 = arith.constant 0 : index
    %9 = vector.load %arg6[%c0_10, %c0_11] : memref<4x1xf32, #tpu.memory_space<vmem>>, vector<4x1xf32>
    %10 = vector.broadcast %9 : vector<4x1xf32> to vector<4x256xf32>
    %11 = arith.addf %8, %10 : vector<4x256xf32>
    %c0_12 = arith.constant 0 : index
    %c0_13 = arith.constant 0 : index
    %c0_14 = arith.constant 0 : index
    %12 = vector.load %arg2[%c0_12, %c0_13, %c0_14] : memref<1x4x256xf32, #tpu.memory_space<vmem>>, vector<1x4x256xf32>
    %13 = vector.shape_cast %12 : vector<1x4x256xf32> to vector<4x256xf32>
    %14 = arith.addf %11, %13 : vector<4x256xf32>
    %cst_15 = arith.constant 0.000000e+00 : f32
    %15 = vector.broadcast %cst_15 : f32 to vector<4x256xf32>
    %16 = arith.maximumf %14, %15 : vector<4x256xf32>
    %c0_16 = arith.constant 0 : index
    %c0_17 = arith.constant 0 : index
    %c0_18 = arith.constant 0 : index
    %17 = vector.load %arg7[%c0_16, %c0_17, %c0_18] : memref<1x4x256xf32, #tpu.memory_space<vmem>>, vector<1x4x256xf32>
    %18 = vector.shape_cast %17 : vector<1x4x256xf32> to vector<4x256xf32>
    %19 = vector.shape_cast %16 : vector<4x256xf32> to vector<1x4x256xf32>
    tpu.vector_store %arg7[%c0_16, %c0_17, %c0_18], %19 {strides = array<i32>} : memref<1x4x256xf32, #tpu.memory_space<vmem>>, vector<1x4x256xf32>,
    return
  }
  func.func @transform_0(%arg0: i32, %arg1: i32) -> (i32, i32, i32) {
    %c0_i32 = arith.constant 0 : i32
    %c0_i32_0 = arith.constant 0 : i32
    return %arg0, %c0_i32, %arg1 : i32, i32, i32
  }
  func.func @transform_1(%arg0: i32, %arg1: i32) -> (i32, i32, i32) {
    %c0_i32 = arith.constant 0 : i32
    %c0_i32_0 = arith.constant 0 : i32
    return %arg0, %c0_i32, %arg1 : i32, i32, i32
  }
  func.func @transform_2(%arg0: i32, %arg1: i32) -> (i32, i32) {
    %c0_i32 = arith.constant 0 : i32
    %c0_i32_0 = arith.constant 0 : i32
    %c0_i32_1 = arith.constant 0 : i32
    return %c0_i32, %c0_i32_0 : i32, i32
  }
  func.func @transform_3(%arg0: i32, %arg1: i32) -> (i32, i32) {
    %c0_i32 = arith.constant 0 : i32
    %c0_i32_0 = arith.constant 0 : i32
    %c0_i32_1 = arith.constant 0 : i32
    return %c0_i32, %c0_i32_0 : i32, i32
  }
  func.func @transform_4(%arg0: i32, %arg1: i32) -> (i32, i32) {
    %c0_i32 = arith.constant 0 : i32
    %c0_i32_0 = arith.constant 0 : i32
    %c0_i32_1 = arith.constant 0 : i32
    return %c0_i32, %c0_i32_0 : i32, i32
  }
  func.func @transform_5(%arg0: i32, %arg1: i32) -> (i32, i32, i32) {
    %c0_i32 = arith.constant 0 : i32
    %c0_i32_0 = arith.constant 0 : i32
    return %arg0, %c0_i32, %arg1 : i32, i32, i32
  }
}

</mosaic_0001>

<llo_original>
// kernel: tpu_custom_call.1
$region0: #{tpu_custom_call.1}
  #allocation0 [shape = 'u32[]', space=smem, size = 0x4, offset = 0x4, fixed_abs, tag = 'smem constant byte address 0x4 - core index']
  #allocation1 [shape = 'u32[144,128]{1,0:T(1,128)}', space=vmem, size = 0x12000, scoped, tag = 'internal scratch']
  %s0 = inlined_call_operand.hbm [shape: f32[2,4,256], index: 0, kind: input, shape index: {}]
  %s1 = inlined_call_operand.hbm [shape: f32[2,4,256], index: 1, kind: input, shape index: {}]
  %s2 = inlined_call_operand.vmem [shape: f32[4,4], index: 2, kind: input, shape index: {}]
  %s3 = inlined_call_operand.vmem [shape: f32[4,4], index: 3, kind: input, shape index: {}]
  %s4 = inlined_call_operand.vmem [shape: f32[4,1], index: 4, kind: input, shape index: {}]
  %s5 = inlined_call_operand.hbm [shape: f32[2,4,256], index: 5, kind: output, shape index: {}]
  %s6 = sld [smem:[#allocation0]]
  $region61: #{tpu_custom_call.1} parent=0
    _
  %s8 = ssub.s32 1, %s6
  %s9 = scalar_select 0, %s8, %s6
  $region1: #{tpu_custom_call.1} parent=0
    #allocation2 [shape = 'u8[8192]{0}', space=vmem, size = 0x2000, scoped, tag = 'input window, operand 0']
    #allocation3 [shape = 's32[2]{0}', space=sflag, size = 0x8, scoped, tag = 'scoped memory for tpu_custom_call.1']
    #allocation4 [shape = 's32[2]{0}', space=sflag, size = 0x8, scoped, tag = 'scoped memory for tpu_custom_call.1']
    #allocation5 [shape = 'u8[8192]{0}', space=vmem, size = 0x2000, scoped, tag = 'input window, operand 1']
    #allocation6 [shape = 's32[2]{0}', space=sflag, size = 0x8, scoped, tag = 'scoped memory for tpu_custom_call.1']
    #allocation7 [shape = 'u8[8192]{0}', space=vmem, size = 0x2000, scoped, tag = 'output window, operand 0']
    %10 = vsyncpa [#allocation3], 0
    %s11 = scalar_lea.sflag [#allocation3], 1
    %12 = vsyncpa %s11, 0
    %13 = vsyncpa [#allocation6], 0
    %s14 = scalar_lea.sflag [#allocation6], 1
    %15 = vsyncpa %s14, 0
    %16 = vsyncpa [#allocation4], 0
    %s17 = scalar_lea.sflag [#allocation4], 1
    %18 = vsyncpa %s17, 0
    loop: start=0, step=1, limit=4
    $region2: #{tpu_custom_call.1} parent=1 // loop_pre_header
      _
    $region3: #{tpu_custom_call.1} parent=1 // loop_header
      %s20 = sphi 0, %s24
      %p21 = scmp.ge.s32.totalorder %s20, 4
      %s27 = sphi 0, %s39
      %s28 = sphi 0, %s35
      %s29 = sphi 0, %s27
      %s30 = sphi 0, %s28
      %s31 = sphi 0, %s29
      %s32 = sphi 0, %s30
      %s44 = sphi 0, %s46
      %s47 = sphi 0, %s44
      %s48 = sphi 0, %s47
      %s64 = sphi 0, %s48
      %s72 = sphi 0, %s74
      %s75 = sphi 0, %s72
      %s76 = sphi 0, %s75
      %s92 = sphi 0, %s76
      %s96 = sphi 0, %s96
      %s98 = sphi 0, %s96
      %s99 = sphi 0, %s98
      %s113 = sphi 0, %s99
      %s117 = sphi 0, %s117
      %s119 = sphi 0, %s117
      %s120 = sphi 0, %s119
      %s134 = sphi 0, %s120
      %s138 = sphi 0, %s138
      %s140 = sphi 0, %s138
      %s141 = sphi 0, %s140
      %s155 = sphi 0, %s141
      %s163 = sphi 0, %s165
      %s166 = sphi 0, %s163
      %s167 = sphi 0, %s166
      %s183 = sphi 0, %s167
    $region4: #{tpu_custom_call.1} parent=1 // loop_header_branch
      %23 = sbr.rel (%p21) target = $region8
    $region5: #{tpu_custom_call.1} parent=1 // loop_body
      %s25 = ssub.s32 %s20, 1
      %s26 = ssub.s32 %s20, 2
      %s33 = sadd.s32 1, %s28
      %p34 = scmp.ge.s32.totalorder %s33, 1
      %s35 = scalar_select %p34, 0, %s33
      %s36 = sadd.s32 1, %s27
      %s37 = scalar_select %p34, %s36, %s27
      %p38 = scmp.ge.s32.totalorder %s37, 2
      %s39 = scalar_select %p38, 0, %s37
      %s40 = ssub.s32 %s27, %s39
      %s41 = ssub.s32 %s28, %s35
      %s42 = sor.u32 %s40, %s41
      %p43 = scmp.eq.s32.totalorder %s42, 0
      %s45 = sadd.s32 %s44, 1
      %s46 = scalar_select %p43, %s44, %s45
      %p49 = pneg %p43
      %p50 = scmp.eq.s32.totalorder %s20, 1
      %p51 = por %p49, %p50
      %p52 = scmp.ne.s32.totalorder %s44, %s47
      %p53 = scmp.eq.s32.totalorder %s20, 0
      %p54 = por %p52, %p53
      %p55 = scmp.ne.s32.totalorder %s44, %s47
      %p56 = scmp.eq.s32.totalorder %s25, 1
      %p57 = por %p55, %p56
      %p58 = scmp.ne.s32.totalorder %s47, %s48
      %p59 = scmp.eq.s32.totalorder %s25, 0
      %p60 = por %p58, %p59
      %p61 = scmp.ne.s32.totalorder %s47, %s48
      %p62 = scmp.eq.s32.totalorder %s26, 1
      %p63 = por %p61, %p62
      %p65 = scmp.ne.s32.totalorder %s48, %s64
      %p66 = scmp.eq.s32.totalorder %s26, 0
      %p67 = por %p65, %p66
      %s68 = ssub.s32 %s27, %s39
      %s69 = ssub.s32 %s28, %s35
      %s70 = sor.u32 %s68, %s69
      %p71 = scmp.eq.s32.totalorder %s70, 0
      %s73 = sadd.s32 %s72, 1
      %s74 = scalar_select %p71, %s72, %s73
      %p77 = pneg %p71
      %p78 = scmp.eq.s32.totalorder %s20, 1
      %p79 = por %p77, %p78
      %p80 = scmp.ne.s32.totalorder %s72, %s75
      %p81 = scmp.eq.s32.totalorder %s20, 0
      %p82 = por %p80, %p81
      %p83 = scmp.ne.s32.totalorder %s72, %s75
      %p84 = scmp.eq.s32.totalorder %s25, 1
      %p85 = por %p83, %p84
      %p86 = scmp.ne.s32.totalorder %s75, %s76
      %p87 = scmp.eq.s32.totalorder %s25, 0
      %p88 = por %p86, %p87
      %p89 = scmp.ne.s32.totalorder %s75, %s76
      %p90 = scmp.eq.s32.totalorder %s26, 1
      %p91 = por %p89, %p90
      %p93 = scmp.ne.s32.totalorder %s76, %s92
      %p94 = scmp.eq.s32.totalorder %s26, 0
      %p95 = por %p93, %p94
      %s97 = sadd.s32 %s96, 1
      %p100 = scmp.eq.s32.totalorder %s20, 1
      %p101 = scmp.ne.s32.totalorder %s96, %s98
      %p102 = scmp.eq.s32.totalorder %s20, 0
      %p103 = por %p101, %p102
      %p104 = scmp.ne.s32.totalorder %s96, %s98
      %p105 = scmp.eq.s32.totalorder %s25, 1
      %p106 = por %p104, %p105
      %p107 = scmp.ne.s32.totalorder %s98, %s99
      %p108 = scmp.eq.s32.totalorder %s25, 0
      %p109 = por %p107, %p108
      %p110 = scmp.ne.s32.totalorder %s98, %s99
      %p111 = scmp.eq.s32.totalorder %s26, 1
      %p112 = por %p110, %p111
      %p114 = scmp.ne.s32.totalorder %s99, %s113
      %p115 = scmp.eq.s32.totalorder %s26, 0
      %p116 = por %p114, %p115
      %s118 = sadd.s32 %s117, 1
      %p121 = scmp.eq.s32.totalorder %s20, 1
      %p122 = scmp.ne.s32.totalorder %s117, %s119
      %p123 = scmp.eq.s32.totalorder %s20, 0
      %p124 = por %p122, %p123
      %p125 = scmp.ne.s32.totalorder %s117, %s119
      %p126 = scmp.eq.s32.totalorder %s25, 1
      %p127 = por %p125, %p126
      %p128 = scmp.ne.s32.totalorder %s119, %s120
      %p129 = scmp.eq.s32.totalorder %s25, 0
      %p130 = por %p128, %p129
      %p131 = scmp.ne.s32.totalorder %s119, %s120
      %p132 = scmp.eq.s32.totalorder %s26, 1
      %p133 = por %p131, %p132
      %p135 = scmp.ne.s32.totalorder %s120, %s134
      %p136 = scmp.eq.s32.totalorder %s26, 0
      %p137 = por %p135, %p136
      %s139 = sadd.s32 %s138, 1
      %p142 = scmp.eq.s32.totalorder %s20, 1
      %p143 = scmp.ne.s32.totalorder %s138, %s140
      %p144 = scmp.eq.s32.totalorder %s20, 0
      %p145 = por %p143, %p144
      %p146 = scmp.ne.s32.totalorder %s138, %s140
      %p147 = scmp.eq.s32.totalorder %s25, 1
      %p148 = por %p146, %p147
      %p149 = scmp.ne.s32.totalorder %s140, %s141
      %p150 = scmp.eq.s32.totalorder %s25, 0
      %p151 = por %p149, %p150
      %p152 = scmp.ne.s32.totalorder %s140, %s141
      %p153 = scmp.eq.s32.totalorder %s26, 1
      %p154 = por %p152, %p153
      %p156 = scmp.ne.s32.totalorder %s141, %s155
      %p157 = scmp.eq.s32.totalorder %s26, 0
      %p158 = por %p156, %p157
      %s159 = ssub.s32 %s27, %s39
      %s160 = ssub.s32 %s28, %s35
      %s161 = sor.u32 %s159, %s160
      %p162 = scmp.eq.s32.totalorder %s161, 0
      %s164 = sadd.s32 %s163, 1
      %s165 = scalar_select %p162, %s163, %s164
      %p168 = pneg %p162
      %p169 = scmp.eq.s32.totalorder %s20, 1
      %p170 = por %p168, %p169
      %p171 = scmp.ne.s32.totalorder %s163, %s166
      %p172 = scmp.eq.s32.totalorder %s20, 0
      %p173 = por %p171, %p172
      %p174 = scmp.ne.s32.totalorder %s163, %s166
      %p175 = scmp.eq.s32.totalorder %s25, 1
      %p176 = por %p174, %p175
      %p177 = scmp.ne.s32.totalorder %s166, %s167
      %p178 = scmp.eq.s32.totalorder %s25, 0
      %p179 = por %p177, %p178
      %p180 = scmp.ne.s32.totalorder %s166, %s167
      %p181 = scmp.eq.s32.totalorder %s26, 1
      %p182 = por %p180, %p181
      %p184 = scmp.ne.s32.totalorder %s167, %s183
      %p185 = scmp.eq.s32.totalorder %s26, 0
      %p186 = por %p184, %p185
      %p187 = scmp.le.s32.totalorder 1, %s20
      %p188 = scmp.lt.s32.totalorder %s20, 3
      %p189 = pnand %p187, %p188
      %p190 = pneg %p189
      // Predicated region
      $region9: #{tpu_custom_call.1} parent=5 // pred_check
        _
      $region10: #{tpu_custom_call.1} parent=5 // pred_check_branch
        %192 = sbr.rel (%p189) target = $region12
      $region11: #{tpu_custom_call.1} parent=5 // pred_region
        %s193 = ssub.s32 %s20, 1
        // Predicated region
        $region13: #{tpu_custom_call.1} parent=11 // pred_check
          %p194 = pneg %p109
        $region14: #{tpu_custom_call.1} parent=11 // pred_check_branch
          %196 = sbr.rel (%p194) target = $region16
        $region15: #{tpu_custom_call.1} parent=11 // pred_region
          _
        $region16: #{tpu_custom_call.1} parent=11 // pred_fallthru
          _
        // Predicated region
        $region17: #{tpu_custom_call.1} parent=11 // pred_check
          %p197 = pneg %p130
        $region18: #{tpu_custom_call.1} parent=11 // pred_check_branch
          %199 = sbr.rel (%p197) target = $region20
        $region19: #{tpu_custom_call.1} parent=11 // pred_region
          _
        $region20: #{tpu_custom_call.1} parent=11 // pred_fallthru
          _
        // Predicated region
        $region21: #{tpu_custom_call.1} parent=11 // pred_check
          %p200 = pneg %p151
        $region22: #{tpu_custom_call.1} parent=11 // pred_check_branch
          %202 = sbr.rel (%p200) target = $region24
        $region23: #{tpu_custom_call.1} parent=11 // pred_region
          _
        $region24: #{tpu_custom_call.1} parent=11 // pred_fallthru
          _
      $region12: #{tpu_custom_call.1} parent=5 // pred_fallthru
        _
      %p203 = scmp.lt.s32.totalorder %s20, 2
      // Predicated region
      $region25: #{tpu_custom_call.1} parent=5 // pred_check
        %p204 = pneg %p203
      $region26: #{tpu_custom_call.1} parent=5 // pred_check_branch
        %206 = sbr.rel (%p204) target = $region28
      $region27: #{tpu_custom_call.1} parent=5 // pred_region
        // Predicated region
        $region29: #{tpu_custom_call.1} parent=27 // pred_check
          %p207 = pneg %p54
        $region30: #{tpu_custom_call.1} parent=27 // pred_check_branch
          %209 = sbr.rel (%p207) target = $region32
        $region31: #{tpu_custom_call.1} parent=27 // pred_region
          %s210 = sand.u32 %s44, 1
          %s211 = scalar_lea.sflag [#allocation3], %s210
          %s212 = sand.u32 %s44, 1
          %s213 = smul.addr %s212, 8
          %s214 = scalar_lea.vmem [#allocation2], %s213
          %s215 = smul.u32 2, %s28
          %s217 = ssub.s32 128, 128
          %218 = vsyncadd %s211, %s217
          %s219 = smul.addr %s27, 2
          %s220 = sadd.s32 %s215, %s219
          %s221 = smul.addr %s220, 64
          %s222 = scalar_lea.hbm %s0, %s221
          %s224 = sshll.u32 %s214, 4
          %s225 = int_to_ptr.vmem [resolvable:$true] %s224
          %227 = dma.hbm_to_vmem [thread:$0]  %s222, 128, %s225, %s211
        $region32: #{tpu_custom_call.1} parent=27 // pred_fallthru
          _
        // Predicated region
        $region33: #{tpu_custom_call.1} parent=27 // pred_check
          %p228 = pneg %p82
        $region34: #{tpu_custom_call.1} parent=27 // pred_check_branch
          %230 = sbr.rel (%p228) target = $region36
        $region35: #{tpu_custom_call.1} parent=27 // pred_region
          %s231 = sand.u32 %s72, 1
          %s232 = scalar_lea.sflag [#allocation6], %s231
          %s233 = sand.u32 %s72, 1
          %s234 = smul.addr %s233, 8
          %s235 = scalar_lea.vmem [#allocation5], %s234
          %s236 = smul.u32 2, %s28
          %s238 = ssub.s32 128, 128
          %239 = vsyncadd %s232, %s238
          %s240 = smul.addr %s27, 2
          %s241 = sadd.s32 %s236, %s240
          %s242 = smul.addr %s241, 64
          %s243 = scalar_lea.hbm %s1, %s242
          %s245 = sshll.u32 %s235, 4
          %s246 = int_to_ptr.vmem [resolvable:$true] %s245
          %248 = dma.hbm_to_vmem [thread:$0]  %s243, 128, %s246, %s232
        $region36: #{tpu_custom_call.1} parent=27 // pred_fallthru
          _
      $region28: #{tpu_custom_call.1} parent=5 // pred_fallthru
        _
      %p249 = scmp.le.s32.totalorder 1, %s20
      %p250 = scmp.lt.s32.totalorder %s20, 3
      %p251 = pnand %p249, %p250
      %p252 = pneg %p251
      // Predicated region
      $region37: #{tpu_custom_call.1} parent=5 // pred_check
        _
      $region38: #{tpu_custom_call.1} parent=5 // pred_check_branch
        %254 = sbr.rel (%p251) target = $region40
      $region39: #{tpu_custom_call.1} parent=5 // pred_region
        %s255 = ssub.s32 %s20, 1
        %s256 = sand.u32 %s47, 1
        %s257 = scalar_lea.sflag [#allocation3], %s256
        %s258 = sand.u32 %s47, 1
        %s259 = smul.addr %s258, 8
        %s260 = scalar_lea.vmem [#allocation2], %s259
        // Predicated region
        $region41: #{tpu_custom_call.1} parent=39 // pred_check
          %p261 = pneg %p60
        $region42: #{tpu_custom_call.1} parent=39 // pred_check_branch
          %263 = sbr.rel (%p261) target = $region44
        $region43: #{tpu_custom_call.1} parent=39 // pred_region
          %264 = dma.done %s257, 128
        $region44: #{tpu_custom_call.1} parent=39 // pred_fallthru
          _
        %s265 = sand.u32 %s75, 1
        %s266 = scalar_lea.sflag [#allocation6], %s265
        %s267 = sand.u32 %s75, 1
        %s268 = smul.addr %s267, 8
        %s269 = scalar_lea.vmem [#allocation5], %s268
        // Predicated region
        $region45: #{tpu_custom_call.1} parent=39 // pred_check
          %p270 = pneg %p88
        $region46: #{tpu_custom_call.1} parent=39 // pred_check_branch
          %272 = sbr.rel (%p270) target = $region48
        $region47: #{tpu_custom_call.1} parent=39 // pred_region
          %273 = dma.done %s266, 128
        $region48: #{tpu_custom_call.1} parent=39 // pred_fallthru
          _
        %s274 = sand.u32 %s47, 1
        %s275 = scalar_lea.sflag [#allocation3], %s274
        %s276 = sand.u32 %s47, 1
        %s277 = smul.addr %s276, 8
        %s278 = scalar_lea.vmem [#allocation2], %s277
        %p279 = pneg %p60
        %p280 = pneg %p57
        %s281 = sand.u32 %s75, 1
        %s282 = scalar_lea.sflag [#allocation6], %s281
        %s283 = sand.u32 %s75, 1
        %s284 = smul.addr %s283, 8
        %s285 = scalar_lea.vmem [#allocation5], %s284
        %p286 = pneg %p88
        %p287 = pneg %p85
        %p288 = pneg %p109
        %p289 = pneg %p106
        %p290 = pneg %p130
        %p291 = pneg %p127
        %p292 = pneg %p151
        %p293 = pneg %p148
        %p294 = pneg %p179
        %p295 = pneg %p176
        %s296 = sand.u32 %s166, 1
        %s297 = scalar_lea.sflag [#allocation4], %s296
        %s298 = sand.u32 %s166, 1
        %s299 = smul.addr %s298, 8
        %s300 = scalar_lea.vmem [#allocation7], %s299
        %s301 = smul.u32 2, %s30
        %s302 = smul.u32 2, %s30
        %s303 = smul.u32 2, %s30
        %v304 = vld [vmem:[%s2] sm:$0xf]
        %v305 = vld [vmem:[%s260] sm:$0xff]
        %v306 = vld [vmem:[%s3] sm:$0xf]
        %v307 = vld [vmem:[%s269] sm:$0xff]
        %v309 = vcombine.high %v307, %v307
        %vm310 = vcmask 31744
        %v312 = vsel %vm310, %v306, 0
        %vm314 = vcmask 1043456
        %v315 = vsel %vm314, %v307, 0
        %v317 = vsel %vm314, %v309, 0
        %319 = vmatprep.subr.mxu0 %v317
        %320 = vmatpush1.msra.mxu0 %v315
        %321 = vmatprep.subr.mxu0 0.0
        %322 = vmatpush1.msra.mxu0 0.0
        %323 = vmatprep.subr.mxu0 0.0
        %324 = vmatpush1.msra.mxu0 0.0
        %325 = vmatprep.subr.mxu0 0.0
        %326 = vmatpush1.msra.mxu0 0.0
        %327 = vmatprep.subr.mxu0 0.0
        %328 = vmatpush1.msra.mxu0 0.0
        %329 = vmatprep.subr.mxu0 0.0
        %330 = vmatpush1.msra.mxu0 0.0
        %331 = vmatprep.subr.mxu0 0.0
        %332 = vmatpush1.msra.mxu0 0.0
        %333 = vmatprep.subr.mxu0 0.0
        %334 = vmatpush1.msra.mxu0 0.0
        %335 = vmatprep.subr.mxu0 0.0
        %336 = vmatpush1.msra.mxu0 0.0
        %337 = vmatprep.subr.mxu0 0.0
        %338 = vmatpush1.msra.mxu0 0.0
        %339 = vmatprep.subr.mxu0 0.0
        %340 = vmatpush1.msra.mxu0 0.0
        %341 = vmatprep.subr.mxu0 0.0
        %342 = vmatpush1.msra.mxu0 0.0
        %343 = vmatprep.subr.mxu0 0.0
        %344 = vmatpush1.msra.mxu0 0.0
        %345 = vmatprep.subr.mxu0 0.0
        %346 = vmatpush1.msra.mxu0 0.0
        %347 = vmatprep.subr.mxu0 0.0
        %348 = vmatpush1.msra.mxu0 0.0
        %349 = vmatprep.subr.mxu0 0.0
        %350 = vmatpush1.msra.mxu0 0.0
        %351 = vmatprep.subr.mxu0 0.0
        %352 = vmatpush1.msra.mxu0 0.0
        %353 = vmatprep.subr.mxu0 0.0
        %354 = vmatpush1.msra.mxu0 0.0
        %355 = vmatprep.subr.mxu0 0.0
        %356 = vmatpush1.msra.mxu0 0.0
        %357 = vmatprep.subr.mxu0 0.0
        %358 = vmatpush1.msra.mxu0 0.0
        %359 = vmatprep.subr.mxu0 0.0
        %360 = vmatpush1.msra.mxu0 0.0
        %361 = vmatprep.subr.mxu0 0.0
        %362 = vmatpush1.msra.mxu0 0.0
        %363 = vmatprep.subr.mxu0 0.0
        %364 = vmatpush1.msra.mxu0 0.0
        %365 = vmatprep.subr.mxu0 0.0
        %366 = vmatpush1.msra.mxu0 0.0
        %367 = vmatprep.subr.mxu0 0.0
        %368 = vmatpush1.msra.mxu0 0.0
        %369 = vmatprep.subr.mxu0 0.0
        %370 = vmatpush1.msra.mxu0 0.0
        %371 = vmatprep.subr.mxu0 0.0
        %372 = vmatpush1.msra.mxu0 0.0
        %373 = vmatprep.subr.mxu0 0.0
        %374 = vmatpush1.msra.mxu0 0.0
        %375 = vmatprep.subr.mxu0 0.0
        %376 = vmatpush1.msra.mxu0 0.0
        %377 = vmatprep.subr.mxu0 0.0
        %378 = vmatpush1.msra.mxu0 0.0
        %379 = vmatprep.subr.mxu0 0.0
        %380 = vmatpush1.msra.mxu0 0.0
        %381 = vmatprep.subr.mxu0 0.0
        %382 = vmatpush1.msra.mxu0 0.0
        %383 = vmatprep.mubr.f32.mxu0 0.0
        %384 = vmatmul.mubr.f32.gmra.mrb[0].mxu0 %v312
        %v385 = vpop.f32.mrb[0].mxu0
        %v386 = vadd.f32 0.0, %v385
        %v387 = vpop.f32.mrb[0].mxu0
        %v388 = vadd.f32 0.0, %v387
        %389 = vdwg.mxu0
        %v391 = vcombine.high %v305, %v305
        %v393 = vsel %vm310, %v304, 0
        %v395 = vsel %vm314, %v305, 0
        %v397 = vsel %vm314, %v391, 0
        %399 = vmatprep.subr.mxu0 %v397
        %400 = vmatpush1.msra.mxu0 %v395
        %401 = vmatprep.subr.mxu0 0.0
        %402 = vmatpush1.msra.mxu0 0.0
        %403 = vmatprep.subr.mxu0 0.0
        %404 = vmatpush1.msra.mxu0 0.0
        %405 = vmatprep.subr.mxu0 0.0
        %406 = vmatpush1.msra.mxu0 0.0
        %407 = vmatprep.subr.mxu0 0.0
        %408 = vmatpush1.msra.mxu0 0.0
        %409 = vmatprep.subr.mxu0 0.0
        %410 = vmatpush1.msra.mxu0 0.0
        %411 = vmatprep.subr.mxu0 0.0
        %412 = vmatpush1.msra.mxu0 0.0
        %413 = vmatprep.subr.mxu0 0.0
        %414 = vmatpush1.msra.mxu0 0.0
        %415 = vmatprep.subr.mxu0 0.0
        %416 = vmatpush1.msra.mxu0 0.0
        %417 = vmatprep.subr.mxu0 0.0
        %418 = vmatpush1.msra.mxu0 0.0
        %419 = vmatprep.subr.mxu0 0.0
        %420 = vmatpush1.msra.mxu0 0.0
        %421 = vmatprep.subr.mxu0 0.0
        %422 = vmatpush1.msra.mxu0 0.0
        %423 = vmatprep.subr.mxu0 0.0
        %424 = vmatpush1.msra.mxu0 0.0
        %425 = vmatprep.subr.mxu0 0.0
        %426 = vmatpush1.msra.mxu0 0.0
        %427 = vmatprep.subr.mxu0 0.0
        %428 = vmatpush1.msra.mxu0 0.0
        %429 = vmatprep.subr.mxu0 0.0
        %430 = vmatpush1.msra.mxu0 0.0
        %431 = vmatprep.subr.mxu0 0.0
        %432 = vmatpush1.msra.mxu0 0.0
        %433 = vmatprep.subr.mxu0 0.0
        %434 = vmatpush1.msra.mxu0 0.0
        %435 = vmatprep.subr.mxu0 0.0
        %436 = vmatpush1.msra.mxu0 0.0
        %437 = vmatprep.subr.mxu0 0.0
        %438 = vmatpush1.msra.mxu0 0.0
        %439 = vmatprep.subr.mxu0 0.0
        %440 = vmatpush1.msra.mxu0 0.0
        %441 = vmatprep.subr.mxu0 0.0
        %442 = vmatpush1.msra.mxu0 0.0
        %443 = vmatprep.subr.mxu0 0.0
        %444 = vmatpush1.msra.mxu0 0.0
        %445 = vmatprep.subr.mxu0 0.0
        %446 = vmatpush1.msra.mxu0 0.0
        %447 = vmatprep.subr.mxu0 0.0
        %448 = vmatpush1.msra.mxu0 0.0
        %449 = vmatprep.subr.mxu0 0.0
        %450 = vmatpush1.msra.mxu0 0.0
        %451 = vmatprep.subr.mxu0 0.0
        %452 = vmatpush1.msra.mxu0 0.0
        %453 = vmatprep.subr.mxu0 0.0
        %454 = vmatpush1.msra.mxu0 0.0
        %455 = vmatprep.subr.mxu0 0.0
        %456 = vmatpush1.msra.mxu0 0.0
        %457 = vmatprep.subr.mxu0 0.0
        %458 = vmatpush1.msra.mxu0 0.0
        %459 = vmatprep.subr.mxu0 0.0
        %460 = vmatpush1.msra.mxu0 0.0
        %461 = vmatprep.subr.mxu0 0.0
        %462 = vmatpush1.msra.mxu0 0.0
        %463 = vmatprep.mubr.f32.mxu0 0.0
        %464 = vmatmul.mubr.f32.gmra.mrb[0].mxu0 %v393
        %v465 = vpop.f32.mrb[0].mxu0
        %v466 = vadd.f32 %v386, %v465
        %v467 = vpop.f32.mrb[0].mxu0
        %v468 = vadd.f32 %v388, %v467
        %469 = vdwg.mxu0
        %v470 = vld [vmem:[%s4] sm:$0xf]
        %472 = vset.pattern.permute.xlu0 0
        %473 = vperm.xlu0 %472, %v470
        %v474 = vpop.permute.xlu0 %473
        %v476 = vadd.f32 %v466, %v474
        %v477 = vadd.f32 %v468, %v474
        %v479 = vadd.f32 %v476, %v305
        %v480 = vadd.f32 %v477, %v391
        %v481 = vmax.f32 %v479, 0.0
        %v482 = vmax.f32 %v480, 0.0
        %v485 = vcombine.low %v481, %v482
        %487 = vst [vmem:[%s300] sm:$0xff] %v485
        %s488 = sand.u32 %s166, 1
        %s489 = scalar_lea.sflag [#allocation4], %s488
        %s490 = sand.u32 %s166, 1
        %s491 = smul.addr %s490, 8
        %s492 = scalar_lea.vmem [#allocation7], %s491
        // Predicated region
        $region49: #{tpu_custom_call.1} parent=39 // pred_check
          %p493 = pneg %p176
        $region50: #{tpu_custom_call.1} parent=39 // pred_check_branch
          %495 = sbr.rel (%p493) target = $region52
        $region51: #{tpu_custom_call.1} parent=39 // pred_region
          %s496 = smul.u32 2, %s30
          %s498 = ssub.s32 128, 128
          %499 = vsyncadd %s489, %s498
          %s500 = smul.addr %s29, 2
          %s501 = sadd.s32 %s496, %s500
          %s502 = smul.addr %s501, 64
          %s503 = scalar_lea.hbm %s5, %s502
          %s505 = sshll.u32 %s492, 4
          %s506 = int_to_ptr.vmem [resolvable:$true] %s505
          %508 = dma.vmem_to_hbm [thread:$0]  %s506, 128, %s503, %s489
        $region52: #{tpu_custom_call.1} parent=39 // pred_fallthru
          _
      $region40: #{tpu_custom_call.1} parent=5 // pred_fallthru
        _
      %p509 = scmp.le.s32.totalorder 2, %s20
      // Predicated region
      $region53: #{tpu_custom_call.1} parent=5 // pred_check
        %p510 = pneg %p509
      $region54: #{tpu_custom_call.1} parent=5 // pred_check_branch
        %512 = sbr.rel (%p510) target = $region56
      $region55: #{tpu_custom_call.1} parent=5 // pred_region
        %s513 = ssub.s32 %s20, 2
        // Predicated region
        $region57: #{tpu_custom_call.1} parent=55 // pred_check
          %p514 = pneg %p182
        $region58: #{tpu_custom_call.1} parent=55 // pred_check_branch
          %516 = sbr.rel (%p514) target = $region60
        $region59: #{tpu_custom_call.1} parent=55 // pred_region
          %s517 = sand.u32 %s167, 1
          %s518 = scalar_lea.sflag [#allocation4], %s517
          %s519 = sand.u32 %s167, 1
          %s520 = smul.addr %s519, 8
          %s521 = scalar_lea.vmem [#allocation7], %s520
          %522 = dma.done %s518, 128
        $region60: #{tpu_custom_call.1} parent=55 // pred_fallthru
          _
      $region56: #{tpu_custom_call.1} parent=5 // pred_fallthru
        _
    $region6: #{tpu_custom_call.1} parent=1 // loop_footer
      %s24 = sadd.s32 1, %s20
    $region7: #{tpu_custom_call.1} parent=1 // loop_footer_branch
      %19 = sbr.rel target = $region3
    $region8: #{tpu_custom_call.1} parent=1 // loop_exit
      _
    %523 = vsyncpa [#allocation3], 1
    %s524 = scalar_lea.sflag [#allocation3], 1
    %525 = vsyncpa %s524, 1
    %526 = vsyncpa [#allocation6], 1
    %s527 = scalar_lea.sflag [#allocation6], 1
    %528 = vsyncpa %s527, 1
    %529 = vsyncpa [#allocation4], 1
    %s530 = scalar_lea.sflag [#allocation4], 1
    %531 = vsyncpa %s530, 1

// kernel: tpu_custom_call.1
$region0: #{tpu_custom_call.1}
  #allocation0 [shape = 'u32[]', space=smem, size = 0x4, offset = 0x4, fixed_abs, tag = 'smem constant byte address 0x4 - core index']
  #allocation1 [shape = 'u32[144,128]{1,0:T(1,128)}', space=vmem, size = 0x12000, scoped, tag = 'internal scratch']
  %s0 = inlined_call_operand.hbm [shape: f32[2,4,256], index: 0, kind: input, shape index: {}]
  %s1 = inlined_call_operand.hbm [shape: f32[2,4,256], index: 1, kind: input, shape index: {}]
  %s2 = inlined_call_operand.vmem [shape: f32[4,4], index: 2, kind: input, shape index: {}]
  %s3 = inlined_call_operand.vmem [shape: f32[4,4], index: 3, kind: input, shape index: {}]
  %s4 = inlined_call_operand.vmem [shape: f32[4,1], index: 4, kind: input, shape index: {}]
  %s5 = inlined_call_operand.hbm [shape: f32[2,4,256], index: 5, kind: output, shape index: {}]
  %s6 = sld [smem:[#allocation0]]
  $region61: #{tpu_custom_call.1} parent=0
    _
  %s8 = ssub.s32 1, %s6
  %s9 = scalar_select 0, %s8, %s6
  $region1: #{tpu_custom_call.1} parent=0
    #allocation2 [shape = 'u8[8192]{0}', space=vmem, size = 0x2000, scoped, tag = 'input window, operand 0']
    #allocation3 [shape = 's32[2]{0}', space=sflag, size = 0x8, scoped, tag = 'scoped memory for tpu_custom_call.1']
    #allocation4 [shape = 's32[2]{0}', space=sflag, size = 0x8, scoped, tag = 'scoped memory for tpu_custom_call.1']
    #allocation5 [shape = 'u8[8192]{0}', space=vmem, size = 0x2000, scoped, tag = 'input window, operand 1']
    #allocation6 [shape = 's32[2]{0}', space=sflag, size = 0x8, scoped, tag = 'scoped memory for tpu_custom_call.1']
    #allocation7 [shape = 'u8[8192]{0}', space=vmem, size = 0x2000, scoped, tag = 'output window, operand 0']
    %10 = vsyncpa [#allocation3], 0
    %s11 = scalar_lea.sflag [#allocation3], 1
    %12 = vsyncpa %s11, 0
    %13 = vsyncpa [#allocation6], 0
    %s14 = scalar_lea.sflag [#allocation6], 1
    %15 = vsyncpa %s14, 0
    %16 = vsyncpa [#allocation4], 0
    %s17 = scalar_lea.sflag [#allocation4], 1
    %18 = vsyncpa %s17, 0
    loop: start=0, step=1, limit=4
    $region2: #{tpu_custom_call.1} parent=1 // loop_pre_header
      _
    $region3: #{tpu_custom_call.1} parent=1 // loop_header
      %s20 = sphi 0, %s24
      %p21 = scmp.ge.s32.totalorder %s20, 4
      %s27 = sphi 0, %s39
      %s28 = sphi 0, %s35
      %s29 = sphi 0, %s27
      %s30 = sphi 0, %s28
      %s31 = sphi 0, %s29
      %s32 = sphi 0, %s30
      %s44 = sphi 0, %s46
      %s47 = sphi 0, %s44
      %s48 = sphi 0, %s47
      %s64 = sphi 0, %s48
      %s72 = sphi 0, %s74
      %s75 = sphi 0, %s72
      %s76 = sphi 0, %s75
      %s92 = sphi 0, %s76
      %s96 = sphi 0, %s96
      %s98 = sphi 0, %s96
      %s99 = sphi 0, %s98
      %s113 = sphi 0, %s99
      %s117 = sphi 0, %s117
      %s119 = sphi 0, %s117
      %s120 = sphi 0, %s119
      %s134 = sphi 0, %s120
      %s138 = sphi 0, %s138
      %s140 = sphi 0, %s138
      %s141 = sphi 0, %s140
      %s155 = sphi 0, %s141
      %s163 = sphi 0, %s165
      %s166 = sphi 0, %s163
      %s167 = sphi 0, %s166
      %s183 = sphi 0, %s167
    $region4: #{tpu_custom_call.1} parent=1 // loop_header_branch
      %23 = sbr.rel (%p21) target = $region8
    $region5: #{tpu_custom_call.1} parent=1 // loop_body
      %s25 = ssub.s32 %s20, 1
      %s26 = ssub.s32 %s20, 2
      %s33 = sadd.s32 1, %s28
      %p34 = scmp.ge.s32.totalorder %s33, 1
      %s35 = scalar_select %p34, 0, %s33
      %s36 = sadd.s32 1, %s27
      %s37 = scalar_select %p34, %s36, %s27
      %p38 = scmp.ge.s32.totalorder %s37, 2
      %s39 = scalar_select %p38, 0, %s37
      %s40 = ssub.s32 %s27, %s39
      %s41 = ssub.s32 %s28, %s35
      %s42 = sor.u32 %s40, %s41
      %p43 = scmp.eq.s32.totalorder %s42, 0
      %s45 = sadd.s32 %s44, 1
      %s46 = scalar_select %p43, %s44, %s45
      %p49 = pneg %p43
      %p50 = scmp.eq.s32.totalorder %s20, 1
      %p51 = por %p49, %p50
      %p52 = scmp.ne.s32.totalorder %s44, %s47
      %p53 = scmp.eq.s32.totalorder %s20, 0
      %p54 = por %p52, %p53
      %p55 = scmp.ne.s32.totalorder %s44, %s47
      %p56 = scmp.eq.s32.totalorder %s25, 1
      %p57 = por %p55, %p56
      %p58 = scmp.ne.s32.totalorder %s47, %s48
      %p59 = scmp.eq.s32.totalorder %s25, 0
      %p60 = por %p58, %p59
      %p61 = scmp.ne.s32.totalorder %s47, %s48
      %p62 = scmp.eq.s32.totalorder %s26, 1
      %p63 = por %p61, %p62
      %p65 = scmp.ne.s32.totalorder %s48, %s64
      %p66 = scmp.eq.s32.totalorder %s26, 0
      %p67 = por %p65, %p66
      %s68 = ssub.s32 %s27, %s39
      %s69 = ssub.s32 %s28, %s35
      %s70 = sor.u32 %s68, %s69
      %p71 = scmp.eq.s32.totalorder %s70, 0
      %s73 = sadd.s32 %s72, 1
      %s74 = scalar_select %p71, %s72, %s73
      %p77 = pneg %p71
      %p78 = scmp.eq.s32.totalorder %s20, 1
      %p79 = por %p77, %p78
      %p80 = scmp.ne.s32.totalorder %s72, %s75
      %p81 = scmp.eq.s32.totalorder %s20, 0
      %p82 = por %p80, %p81
      %p83 = scmp.ne.s32.totalorder %s72, %s75
      %p84 = scmp.eq.s32.totalorder %s25, 1
      %p85 = por %p83, %p84
      %p86 = scmp.ne.s32.totalorder %s75, %s76
      %p87 = scmp.eq.s32.totalorder %s25, 0
      %p88 = por %p86, %p87
      %p89 = scmp.ne.s32.totalorder %s75, %s76
      %p90 = scmp.eq.s32.totalorder %s26, 1
      %p91 = por %p89, %p90
      %p93 = scmp.ne.s32.totalorder %s76, %s92
      %p94 = scmp.eq.s32.totalorder %s26, 0
      %p95 = por %p93, %p94
      %s97 = sadd.s32 %s96, 1
      %p100 = scmp.eq.s32.totalorder %s20, 1
      %p101 = scmp.ne.s32.totalorder %s96, %s98
      %p102 = scmp.eq.s32.totalorder %s20, 0
      %p103 = por %p101, %p102
      %p104 = scmp.ne.s32.totalorder %s96, %s98
      %p105 = scmp.eq.s32.totalorder %s25, 1
      %p106 = por %p104, %p105
      %p107 = scmp.ne.s32.totalorder %s98, %s99
      %p108 = scmp.eq.s32.totalorder %s25, 0
      %p109 = por %p107, %p108
      %p110 = scmp.ne.s32.totalorder %s98, %s99
      %p111 = scmp.eq.s32.totalorder %s26, 1
      %p112 = por %p110, %p111
      %p114 = scmp.ne.s32.totalorder %s99, %s113
      %p115 = scmp.eq.s32.totalorder %s26, 0
      %p116 = por %p114, %p115
      %s118 = sadd.s32 %s117, 1
      %p121 = scmp.eq.s32.totalorder %s20, 1
      %p122 = scmp.ne.s32.totalorder %s117, %s119
      %p123 = scmp.eq.s32.totalorder %s20, 0
      %p124 = por %p122, %p123
      %p125 = scmp.ne.s32.totalorder %s117, %s119
      %p126 = scmp.eq.s32.totalorder %s25, 1
      %p127 = por %p125, %p126
      %p128 = scmp.ne.s32.totalorder %s119, %s120
      %p129 = scmp.eq.s32.totalorder %s25, 0
      %p130 = por %p128, %p129
      %p131 = scmp.ne.s32.totalorder %s119, %s120
      %p132 = scmp.eq.s32.totalorder %s26, 1
      %p133 = por %p131, %p132
      %p135 = scmp.ne.s32.totalorder %s120, %s134
      %p136 = scmp.eq.s32.totalorder %s26, 0
      %p137 = por %p135, %p136
      %s139 = sadd.s32 %s138, 1
      %p142 = scmp.eq.s32.totalorder %s20, 1
      %p143 = scmp.ne.s32.totalorder %s138, %s140
      %p144 = scmp.eq.s32.totalorder %s20, 0
      %p145 = por %p143, %p144
      %p146 = scmp.ne.s32.totalorder %s138, %s140
      %p147 = scmp.eq.s32.totalorder %s25, 1
      %p148 = por %p146, %p147
      %p149 = scmp.ne.s32.totalorder %s140, %s141
      %p150 = scmp.eq.s32.totalorder %s25, 0
      %p151 = por %p149, %p150
      %p152 = scmp.ne.s32.totalorder %s140, %s141
      %p153 = scmp.eq.s32.totalorder %s26, 1
      %p154 = por %p152, %p153
      %p156 = scmp.ne.s32.totalorder %s141, %s155
      %p157 = scmp.eq.s32.totalorder %s26, 0
      %p158 = por %p156, %p157
      %s159 = ssub.s32 %s27, %s39
      %s160 = ssub.s32 %s28, %s35
      %s161 = sor.u32 %s159, %s160
      %p162 = scmp.eq.s32.totalorder %s161, 0
      %s164 = sadd.s32 %s163, 1
      %s165 = scalar_select %p162, %s163, %s164
      %p168 = pneg %p162
      %p169 = scmp.eq.s32.totalorder %s20, 1
      %p170 = por %p168, %p169
      %p171 = scmp.ne.s32.totalorder %s163, %s166
      %p172 = scmp.eq.s32.totalorder %s20, 0
      %p173 = por %p171, %p172
      %p174 = scmp.ne.s32.totalorder %s163, %s166
      %p175 = scmp.eq.s32.totalorder %s25, 1
      %p176 = por %p174, %p175
      %p177 = scmp.ne.s32.totalorder %s166, %s167
      %p178 = scmp.eq.s32.totalorder %s25, 0
      %p179 = por %p177, %p178
      %p180 = scmp.ne.s32.totalorder %s166, %s167
      %p181 = scmp.eq.s32.totalorder %s26, 1
      %p182 = por %p180, %p181
      %p184 = scmp.ne.s32.totalorder %s167, %s183
      %p185 = scmp.eq.s32.totalorder %s26, 0
      %p186 = por %p184, %p185
      %p187 = scmp.le.s32.totalorder 1, %s20
      %p188 = scmp.lt.s32.totalorder %s20, 3
      %p189 = pnand %p187, %p188
      %p190 = pneg %p189
      // Predicated region
      $region9: #{tpu_custom_call.1} parent=5 // pred_check
        _
      $region10: #{tpu_custom_call.1} parent=5 // pred_check_branch
        %192 = sbr.rel (%p189) target = $region12
      $region11: #{tpu_custom_call.1} parent=5 // pred_region
        %s193 = ssub.s32 %s20, 1
        // Predicated region
        $region13: #{tpu_custom_call.1} parent=11 // pred_check
          %p194 = pneg %p109
        $region14: #{tpu_custom_call.1} parent=11 // pred_check_branch
          %196 = sbr.rel (%p194) target = $region16
        $region15: #{tpu_custom_call.1} parent=11 // pred_region
          _
        $region16: #{tpu_custom_call.1} parent=11 // pred_fallthru
          _
        // Predicated region
        $region17: #{tpu_custom_call.1} parent=11 // pred_check
          %p197 = pneg %p130
        $region18: #{tpu_custom_call.1} parent=11 // pred_check_branch
          %199 = sbr.rel (%p197) target = $region20
        $region19: #{tpu_custom_call.1} parent=11 // pred_region
          _
        $region20: #{tpu_custom_call.1} parent=11 // pred_fallthru
          _
        // Predicated region
        $region21: #{tpu_custom_call.1} parent=11 // pred_check
          %p200 = pneg %p151
        $region22: #{tpu_custom_call.1} parent=11 // pred_check_branch
          %202 = sbr.rel (%p200) target = $region24
        $region23: #{tpu_custom_call.1} parent=11 // pred_region
          _
        $region24: #{tpu_custom_call.1} parent=11 // pred_fallthru
          _
      $region12: #{tpu_custom_call.1} parent=5 // pred_fallthru
        _
      %p203 = scmp.lt.s32.totalorder %s20, 2
      // Predicated region
      $region25: #{tpu_custom_call.1} parent=5 // pred_check
        %p204 = pneg %p203
      $region26: #{tpu_custom_call.1} parent=5 // pred_check_branch
        %206 = sbr.rel (%p204) target = $region28
      $region27: #{tpu_custom_call.1} parent=5 // pred_region
        // Predicated region
        $region29: #{tpu_custom_call.1} parent=27 // pred_check
          %p207 = pneg %p54
        $region30: #{tpu_custom_call.1} parent=27 // pred_check_branch
          %209 = sbr.rel (%p207) target = $region32
        $region31: #{tpu_custom_call.1} parent=27 // pred_region
          %s210 = sand.u32 %s44, 1
          %s211 = scalar_lea.sflag [#allocation3], %s210
          %s212 = sand.u32 %s44, 1
          %s213 = smul.addr %s212, 8
          %s214 = scalar_lea.vmem [#allocation2], %s213
          %s215 = smul.u32 2, %s28
          %s217 = ssub.s32 128, 128
          %218 = vsyncadd %s211, %s217
          %s219 = smul.addr %s27, 2
          %s220 = sadd.s32 %s215, %s219
          %s221 = smul.addr %s220, 64
          %s222 = scalar_lea.hbm %s0, %s221
          %s224 = sshll.u32 %s214, 4
          %s225 = int_to_ptr.vmem [resolvable:$true] %s224
          %227 = dma.hbm_to_vmem [thread:$0]  %s222, 128, %s225, %s211
        $region32: #{tpu_custom_call.1} parent=27 // pred_fallthru
          _
        // Predicated region
        $region33: #{tpu_custom_call.1} parent=27 // pred_check
          %p228 = pneg %p82
        $region34: #{tpu_custom_call.1} parent=27 // pred_check_branch
          %230 = sbr.rel (%p228) target = $region36
        $region35: #{tpu_custom_call.1} parent=27 // pred_region
          %s231 = sand.u32 %s72, 1
          %s232 = scalar_lea.sflag [#allocation6], %s231
          %s233 = sand.u32 %s72, 1
          %s234 = smul.addr %s233, 8
          %s235 = scalar_lea.vmem [#allocation5], %s234
          %s236 = smul.u32 2, %s28
          %s238 = ssub.s32 128, 128
          %239 = vsyncadd %s232, %s238
          %s240 = smul.addr %s27, 2
          %s241 = sadd.s32 %s236, %s240
          %s242 = smul.addr %s241, 64
          %s243 = scalar_lea.hbm %s1, %s242
          %s245 = sshll.u32 %s235, 4
          %s246 = int_to_ptr.vmem [resolvable:$true] %s245
          %248 = dma.hbm_to_vmem [thread:$0]  %s243, 128, %s246, %s232
        $region36: #{tpu_custom_call.1} parent=27 // pred_fallthru
          _
      $region28: #{tpu_custom_call.1} parent=5 // pred_fallthru
        _
      %p249 = scmp.le.s32.totalorder 1, %s20
      %p250 = scmp.lt.s32.totalorder %s20, 3
      %p251 = pnand %p249, %p250
      %p252 = pneg %p251
      // Predicated region
      $region37: #{tpu_custom_call.1} parent=5 // pred_check
        _
      $region38: #{tpu_custom_call.1} parent=5 // pred_check_branch
        %254 = sbr.rel (%p251) target = $region40
      $region39: #{tpu_custom_call.1} parent=5 // pred_region
        %s255 = ssub.s32 %s20, 1
        %s256 = sand.u32 %s47, 1
        %s257 = scalar_lea.sflag [#allocation3], %s256
        %s258 = sand.u32 %s47, 1
        %s259 = smul.addr %s258, 8
        %s260 = scalar_lea.vmem [#allocation2], %s259
        // Predicated region
        $region41: #{tpu_custom_call.1} parent=39 // pred_check
          %p261 = pneg %p60
        $region42: #{tpu_custom_call.1} parent=39 // pred_check_branch
          %263 = sbr.rel (%p261) target = $region44
        $region43: #{tpu_custom_call.1} parent=39 // pred_region
          %264 = dma.done %s257, 128
        $region44: #{tpu_custom_call.1} parent=39 // pred_fallthru
          _
        %s265 = sand.u32 %s75, 1
        %s266 = scalar_lea.sflag [#allocation6], %s265
        %s267 = sand.u32 %s75, 1
        %s268 = smul.addr %s267, 8
        %s269 = scalar_lea.vmem [#allocation5], %s268
        // Predicated region
        $region45: #{tpu_custom_call.1} parent=39 // pred_check
          %p270 = pneg %p88
        $region46: #{tpu_custom_call.1} parent=39 // pred_check_branch
          %272 = sbr.rel (%p270) target = $region48
        $region47: #{tpu_custom_call.1} parent=39 // pred_region
          %273 = dma.done %s266, 128
        $region48: #{tpu_custom_call.1} parent=39 // pred_fallthru
          _
        %s274 = sand.u32 %s47, 1
        %s275 = scalar_lea.sflag [#allocation3], %s274
        %s276 = sand.u32 %s47, 1
        %s277 = smul.addr %s276, 8
        %s278 = scalar_lea.vmem [#allocation2], %s277
        %p279 = pneg %p60
        %p280 = pneg %p57
        %s281 = sand.u32 %s75, 1
        %s282 = scalar_lea.sflag [#allocation6], %s281
        %s283 = sand.u32 %s75, 1
        %s284 = smul.addr %s283, 8
        %s285 = scalar_lea.vmem [#allocation5], %s284
        %p286 = pneg %p88
        %p287 = pneg %p85
        %p288 = pneg %p109
        %p289 = pneg %p106
        %p290 = pneg %p130
        %p291 = pneg %p127
        %p292 = pneg %p151
        %p293 = pneg %p148
        %p294 = pneg %p179
        %p295 = pneg %p176
        %s296 = sand.u32 %s166, 1
        %s297 = scalar_lea.sflag [#allocation4], %s296
        %s298 = sand.u32 %s166, 1
        %s299 = smul.addr %s298, 8
        %s300 = scalar_lea.vmem [#allocation7], %s299
        %s301 = smul.u32 2, %s30
        %s302 = smul.u32 2, %s30
        %s303 = smul.u32 2, %s30
        %v304 = vld [vmem:[%s2] sm:$0xf]
        %v305 = vld [vmem:[%s260] sm:$0xff]
        %v306 = vld [vmem:[%s3] sm:$0xf]
        %v307 = vld [vmem:[%s269] sm:$0xff]
        %v309 = vcombine.high %v307, %v307
        %vm310 = vcmask 31744
        %v312 = vsel %vm310, %v306, 0
        %vm314 = vcmask 1043456
        %v315 = vsel %vm314, %v307, 0
        %v317 = vsel %vm314, %v309, 0
        %319 = vmatprep.subr.mxu0 %v317
        %320 = vmatpush1.msra.mxu0 %v315
        %321 = vmatprep.subr.mxu0 0.0
        %322 = vmatpush1.msra.mxu0 0.0
        %323 = vmatprep.subr.mxu0 0.0
        %324 = vmatpush1.msra.mxu0 0.0
        %325 = vmatprep.subr.mxu0 0.0
        %326 = vmatpush1.msra.mxu0 0.0
        %327 = vmatprep.subr.mxu0 0.0
        %328 = vmatpush1.msra.mxu0 0.0
        %329 = vmatprep.subr.mxu0 0.0
        %330 = vmatpush1.msra.mxu0 0.0
        %331 = vmatprep.subr.mxu0 0.0
        %332 = vmatpush1.msra.mxu0 0.0
        %333 = vmatprep.subr.mxu0 0.0
        %334 = vmatpush1.msra.mxu0 0.0
        %335 = vmatprep.subr.mxu0 0.0
        %336 = vmatpush1.msra.mxu0 0.0
        %337 = vmatprep.subr.mxu0 0.0
        %338 = vmatpush1.msra.mxu0 0.0
        %339 = vmatprep.subr.mxu0 0.0
        %340 = vmatpush1.msra.mxu0 0.0
        %341 = vmatprep.subr.mxu0 0.0
        %342 = vmatpush1.msra.mxu0 0.0
        %343 = vmatprep.subr.mxu0 0.0
        %344 = vmatpush1.msra.mxu0 0.0
        %345 = vmatprep.subr.mxu0 0.0
        %346 = vmatpush1.msra.mxu0 0.0
        %347 = vmatprep.subr.mxu0 0.0
        %348 = vmatpush1.msra.mxu0 0.0
        %349 = vmatprep.subr.mxu0 0.0
        %350 = vmatpush1.msra.mxu0 0.0
        %351 = vmatprep.subr.mxu0 0.0
        %352 = vmatpush1.msra.mxu0 0.0
        %353 = vmatprep.subr.mxu0 0.0
        %354 = vmatpush1.msra.mxu0 0.0
        %355 = vmatprep.subr.mxu0 0.0
        %356 = vmatpush1.msra.mxu0 0.0
        %357 = vmatprep.subr.mxu0 0.0
        %358 = vmatpush1.msra.mxu0 0.0
        %359 = vmatprep.subr.mxu0 0.0
        %360 = vmatpush1.msra.mxu0 0.0
        %361 = vmatprep.subr.mxu0 0.0
        %362 = vmatpush1.msra.mxu0 0.0
        %363 = vmatprep.subr.mxu0 0.0
        %364 = vmatpush1.msra.mxu0 0.0
        %365 = vmatprep.subr.mxu0 0.0
        %366 = vmatpush1.msra.mxu0 0.0
        %367 = vmatprep.subr.mxu0 0.0
        %368 = vmatpush1.msra.mxu0 0.0
        %369 = vmatprep.subr.mxu0 0.0
        %370 = vmatpush1.msra.mxu0 0.0
        %371 = vmatprep.subr.mxu0 0.0
        %372 = vmatpush1.msra.mxu0 0.0
        %373 = vmatprep.subr.mxu0 0.0
        %374 = vmatpush1.msra.mxu0 0.0
        %375 = vmatprep.subr.mxu0 0.0
        %376 = vmatpush1.msra.mxu0 0.0
        %377 = vmatprep.subr.mxu0 0.0
        %378 = vmatpush1.msra.mxu0 0.0
        %379 = vmatprep.subr.mxu0 0.0
        %380 = vmatpush1.msra.mxu0 0.0
        %381 = vmatprep.subr.mxu0 0.0
        %382 = vmatpush1.msra.mxu0 0.0
        %383 = vmatprep.mubr.f32.mxu0 0.0
        %384 = vmatmul.mubr.f32.gmra.mrb[0].mxu0 %v312
        %v385 = vpop.f32.mrb[0].mxu0
        %v386 = vadd.f32 0.0, %v385
        %v387 = vpop.f32.mrb[0].mxu0
        %v388 = vadd.f32 0.0, %v387
        %389 = vdwg.mxu0
        %v391 = vcombine.high %v305, %v305
        %v393 = vsel %vm310, %v304, 0
        %v395 = vsel %vm314, %v305, 0
        %v397 = vsel %vm314, %v391, 0
        %399 = vmatprep.subr.mxu0 %v397
        %400 = vmatpush1.msra.mxu0 %v395
        %401 = vmatprep.subr.mxu0 0.0
        %402 = vmatpush1.msra.mxu0 0.0
        %403 = vmatprep.subr.mxu0 0.0
        %404 = vmatpush1.msra.mxu0 0.0
        %405 = vmatprep.subr.mxu0 0.0
        %406 = vmatpush1.msra.mxu0 0.0
        %407 = vmatprep.subr.mxu0 0.0
        %408 = vmatpush1.msra.mxu0 0.0
        %409 = vmatprep.subr.mxu0 0.0
        %410 = vmatpush1.msra.mxu0 0.0
        %411 = vmatprep.subr.mxu0 0.0
        %412 = vmatpush1.msra.mxu0 0.0
        %413 = vmatprep.subr.mxu0 0.0
        %414 = vmatpush1.msra.mxu0 0.0
        %415 = vmatprep.subr.mxu0 0.0
        %416 = vmatpush1.msra.mxu0 0.0
        %417 = vmatprep.subr.mxu0 0.0
        %418 = vmatpush1.msra.mxu0 0.0
        %419 = vmatprep.subr.mxu0 0.0
        %420 = vmatpush1.msra.mxu0 0.0
        %421 = vmatprep.subr.mxu0 0.0
        %422 = vmatpush1.msra.mxu0 0.0
        %423 = vmatprep.subr.mxu0 0.0
        %424 = vmatpush1.msra.mxu0 0.0
        %425 = vmatprep.subr.mxu0 0.0
        %426 = vmatpush1.msra.mxu0 0.0
        %427 = vmatprep.subr.mxu0 0.0
        %428 = vmatpush1.msra.mxu0 0.0
        %429 = vmatprep.subr.mxu0 0.0
        %430 = vmatpush1.msra.mxu0 0.0
        %431 = vmatprep.subr.mxu0 0.0
        %432 = vmatpush1.msra.mxu0 0.0
        %433 = vmatprep.subr.mxu0 0.0
        %434 = vmatpush1.msra.mxu0 0.0
        %435 = vmatprep.subr.mxu0 0.0
        %436 = vmatpush1.msra.mxu0 0.0
        %437 = vmatprep.subr.mxu0 0.0
        %438 = vmatpush1.msra.mxu0 0.0
        %439 = vmatprep.subr.mxu0 0.0
        %440 = vmatpush1.msra.mxu0 0.0
        %441 = vmatprep.subr.mxu0 0.0
        %442 = vmatpush1.msra.mxu0 0.0
        %443 = vmatprep.subr.mxu0 0.0
        %444 = vmatpush1.msra.mxu0 0.0
        %445 = vmatprep.subr.mxu0 0.0
        %446 = vmatpush1.msra.mxu0 0.0
        %447 = vmatprep.subr.mxu0 0.0
        %448 = vmatpush1.msra.mxu0 0.0
        %449 = vmatprep.subr.mxu0 0.0
        %450 = vmatpush1.msra.mxu0 0.0
        %451 = vmatprep.subr.mxu0 0.0
        %452 = vmatpush1.msra.mxu0 0.0
        %453 = vmatprep.subr.mxu0 0.0
        %454 = vmatpush1.msra.mxu0 0.0
        %455 = vmatprep.subr.mxu0 0.0
        %456 = vmatpush1.msra.mxu0 0.0
        %457 = vmatprep.subr.mxu0 0.0
        %458 = vmatpush1.msra.mxu0 0.0
        %459 = vmatprep.subr.mxu0 0.0
        %460 = vmatpush1.msra.mxu0 0.0
        %461 = vmatprep.subr.mxu0 0.0
        %462 = vmatpush1.msra.mxu0 0.0
        %463 = vmatprep.mubr.f32.mxu0 0.0
        %464 = vmatmul.mubr.f32.gmra.mrb[0].mxu0 %v393
        %v465 = vpop.f32.mrb[0].mxu0
        %v466 = vadd.f32 %v386, %v465
        %v467 = vpop.f32.mrb[0].mxu0
        %v468 = vadd.f32 %v388, %v467
        %469 = vdwg.mxu0
        %v470 = vld [vmem:[%s4] sm:$0xf]
        %472 = vset.pattern.permute.xlu0 0
        %473 = vperm.xlu0 %472, %v470
        %v474 = vpop.permute.xlu0 %473
        %v476 = vadd.f32 %v466, %v474
        %v477 = vadd.f32 %v468, %v474
        %v479 = vadd.f32 %v476, %v305
        %v480 = vadd.f32 %v477, %v391
        %v481 = vmax.f32 %v479, 0.0
        %v482 = vmax.f32 %v480, 0.0
        %v485 = vcombine.low %v481, %v482
        %487 = vst [vmem:[%s300] sm:$0xff] %v485
        %s488 = sand.u32 %s166, 1
        %s489 = scalar_lea.sflag [#allocation4], %s488
        %s490 = sand.u32 %s166, 1
        %s491 = smul.addr %s490, 8
        %s492 = scalar_lea.vmem [#allocation7], %s491
        // Predicated region
        $region49: #{tpu_custom_call.1} parent=39 // pred_check
          %p493 = pneg %p176
        $region50: #{tpu_custom_call.1} parent=39 // pred_check_branch
          %495 = sbr.rel (%p493) target = $region52
        $region51: #{tpu_custom_call.1} parent=39 // pred_region
          %s496 = smul.u32 2, %s30
          %s498 = ssub.s32 128, 128
          %499 = vsyncadd %s489, %s498
          %s500 = smul.addr %s29, 2
          %s501 = sadd.s32 %s496, %s500
          %s502 = smul.addr %s501, 64
          %s503 = scalar_lea.hbm %s5, %s502
          %s505 = sshll.u32 %s492, 4
          %s506 = int_to_ptr.vmem [resolvable:$true] %s505
          %508 = dma.vmem_to_hbm [thread:$0]  %s506, 128, %s503, %s489
        $region52: #{tpu_custom_call.1} parent=39 // pred_fallthru
          _
      $region40: #{tpu_custom_call.1} parent=5 // pred_fallthru
        _
      %p509 = scmp.le.s32.totalorder 2, %s20
      // Predicated region
      $region53: #{tpu_custom_call.1} parent=5 // pred_check
        %p510 = pneg %p509
      $region54: #{tpu_custom_call.1} parent=5 // pred_check_branch
        %512 = sbr.rel (%p510) target = $region56
      $region55: #{tpu_custom_call.1} parent=5 // pred_region
        %s513 = ssub.s32 %s20, 2
        // Predicated region
        $region57: #{tpu_custom_call.1} parent=55 // pred_check
          %p514 = pneg %p182
        $region58: #{tpu_custom_call.1} parent=55 // pred_check_branch
          %516 = sbr.rel (%p514) target = $region60
        $region59: #{tpu_custom_call.1} parent=55 // pred_region
          %s517 = sand.u32 %s167, 1
          %s518 = scalar_lea.sflag [#allocation4], %s517
          %s519 = sand.u32 %s167, 1
          %s520 = smul.addr %s519, 8
          %s521 = scalar_lea.vmem [#allocation7], %s520
          %522 = dma.done %s518, 128
        $region60: #{tpu_custom_call.1} parent=55 // pred_fallthru
          _
      $region56: #{tpu_custom_call.1} parent=5 // pred_fallthru
        _
    $region6: #{tpu_custom_call.1} parent=1 // loop_footer
      %s24 = sadd.s32 1, %s20
    $region7: #{tpu_custom_call.1} parent=1 // loop_footer_branch
      %19 = sbr.rel target = $region3
    $region8: #{tpu_custom_call.1} parent=1 // loop_exit
      _
    %523 = vsyncpa [#allocation3], 1
    %s524 = scalar_lea.sflag [#allocation3], 1
    %525 = vsyncpa %s524, 1
    %526 = vsyncpa [#allocation6], 1
    %s527 = scalar_lea.sflag [#allocation6], 1
    %528 = vsyncpa %s527, 1
    %529 = vsyncpa [#allocation4], 1
    %s530 = scalar_lea.sflag [#allocation4], 1
    %531 = vsyncpa %s530, 1

</llo_original>
